<compile_context>
chip_gen: v6e
topology: v6e:2x2x1
jax: 0.10.0
libtpu: 0.0.40
codegen_flags: <defaults>
</compile_context>

<pallas_src>
import functools

import jax
import jax.numpy as jnp
from jax.experimental import pallas as pl
from jax.experimental.pallas import tpu as pltpu

KH = KW = 4
PAD = 1
EPS = 1e-5
NEG_SLOPE = 0.2


def _round_up(x, m):
    return ((x + m - 1) // m) * m


def cnn_block_forward(x, weight, gamma, beta, stride, *,
                      out_dtype=jnp.float32, nchw_output=True,
                      tile_m=None, tile_k=None):
    """x: (N, C_in, H, W) f32; weight: (C_out, C_in, 4, 4) f32 (PyTorch layout);
    gamma/beta: (C_out,).  Training-mode BatchNorm (batch statistics)."""
    N, C_in, H, W = x.shape
    C_out = weight.shape[0]

    H_out = (H + 2 * PAD - KH) // stride + 1
    W_out = (W + 2 * PAD - KW) // stride + 1
    M = N * H_out * W_out
    K = C_in * KH * KW

    # ---- tiling -----------------------------------------------------------
    TK = tile_k if tile_k is not None else min(2048, _round_up(K, 128))
    K_pad = _round_up(K, TK)
    C_in_pad = K_pad // (KH * KW)          # K_pad % 128 == 0  =>  % 16 == 0
    TM = tile_m if tile_m is not None else min(1024, _round_up(M, 128))
    N_pad = _round_up(C_out, 128)          # lane-dense GEMM output
    grid_m = pl.cdiv(M, TM)
    grid_k = K_pad // TK

    # ---- patch matrix: bf16, channel-padded up front, written once ---------
    x_nhwc = jnp.transpose(x, (0, 2, 3, 1)).astype(jnp.bfloat16)
    x_nhwc = jnp.pad(x_nhwc, ((0, 0), (0, 0), (0, 0), (0, C_in_pad - C_in)))
    xp = jnp.pad(x_nhwc, ((0, 0), (PAD, PAD), (PAD, PAD), (0, 0)),
                 mode="reflect")
    # Output channels of the patches are ordered (C_in_pad, KH, KW) with the
    # input channel slowest — exactly the flattened PyTorch weight ordering.
    patches = jax.lax.conv_general_dilated_patches(
        xp, filter_shape=(KH, KW), window_strides=(stride, stride),
        padding="VALID", dimension_numbers=("NHWC", "HWIO", "NHWC"))
    patches = patches.reshape(M, K_pad)            # free reshape, no HBM pad

    # GEMM weight (K_pad, N_pad) bf16: pad C_in (trailing K slots) and C_out.
    w_gemm = jnp.pad(weight.astype(jnp.bfloat16),
                     ((0, 0), (0, C_in_pad - C_in), (0, 0), (0, 0)))
    w_gemm = w_gemm.reshape(C_out, K_pad).T
    w_gemm = jnp.pad(w_gemm, ((0, 0), (0, N_pad - C_out)))

    # ---- kernel 1: conv GEMM (bf16 MXU, f32 acc) + per-M-tile BN moments ----
    def conv_gemm_kernel(p_ref, w_ref, o_ref, sum_ref, ssq_ref, acc_ref):
        i = pl.program_id(0)
        k = pl.program_id(1)

        @pl.when(k == 0)
        def _():
            acc_ref[...] = jnp.zeros_like(acc_ref)

        k0 = pl.multiple_of(k * TK, TK)
        acc_ref[...] += jnp.dot(p_ref[...], w_ref[pl.ds(k0, TK), :],
                                preferred_element_type=jnp.float32)

        @pl.when(k == pl.num_programs(1) - 1)
        def _():
            acc = acc_ref[...]                       # f32 (TM, N_pad)
            o_ref[...] = acc.astype(o_ref.dtype)     # bf16 conv output
            # Per-tile BN partial moments from the f32 accumulator.  Mask rows
            # beyond M: the last (partial) M tile reads garbage rows from the
            # partially-filled input block and they must not pollute the stats.
            row = i * TM + jax.lax.broadcasted_iota(jnp.int32, (TM, 1), 0)
            accm = jnp.where(row < M, acc, 0.0)
            sum_ref[...] = jnp.sum(accm.reshape(TM // 8, 8, N_pad), axis=0)
            ssq_ref[...] = jnp.sum((accm * accm).reshape(TM // 8, 8, N_pad),
                                   axis=0)

    conv_out, sum_parts, ssq_parts = pl.pallas_call(
        conv_gemm_kernel,
        out_shape=(
            jax.ShapeDtypeStruct((M, N_pad), jnp.bfloat16),          # conv out
            jax.ShapeDtypeStruct((grid_m * 8, N_pad), jnp.float32),  # Σx
            jax.ShapeDtypeStruct((grid_m * 8, N_pad), jnp.float32),  # Σx²
        ),
        grid=(grid_m, grid_k),
        in_specs=[
            pl.BlockSpec((TM, TK), lambda i, k: (i, k)),
            # Whole GEMM weight resident in VMEM (constant block index), worst
            # realistic pix2pix layer is 8 MiB bf16; sliced along K in-kernel.
            pl.BlockSpec((K_pad, N_pad), lambda i, k: (0, 0)),
        ],
        out_specs=(
            pl.BlockSpec((TM, N_pad), lambda i, k: (i, 0)),
            pl.BlockSpec((8, N_pad), lambda i, k: (i, 0)),
            pl.BlockSpec((8, N_pad), lambda i, k: (i, 0)),
        ),
        scratch_shapes=[pltpu.VMEM((TM, N_pad), jnp.float32)],
        compiler_params=pltpu.CompilerParams(
            # Per-M-tile moment partials => no output block is shared across
            # M tiles, so "parallel" on M is race-free (2 TCs on v7x).
            dimension_semantics=("parallel", "arbitrary"),
            # Worst realistic layer (C_in=C_out=512, TM=1024, TK=2048):
            #   patches 2x4 MiB + weight <=2x8 MiB + out 2x1 MiB + acc 2 MiB
            #   ~= 28 MiB; 48 MiB leaves headroom and fits v7x's 64 MiB/TC.
            vmem_limit_bytes=48 * 1024 * 1024,
        ),
    )(patches, w_gemm)

    # ---- fold BN (batch stats, biased variance) into per-channel scale/shift
    col_sum = jnp.sum(sum_parts, axis=0)
    col_ssq = jnp.sum(ssq_parts, axis=0)
    mean = col_sum / M
    # TODO(synk): E[x^2]-E[x]^2 can cancel when |mean| >> std at very large M;
    # switch to a shifted / two-pass formulation if that regime matters.
    var = jnp.maximum(col_ssq / M - mean * mean, 0.0)
    rstd = jax.lax.rsqrt(var + EPS)
    gamma_p = jnp.pad(gamma.astype(jnp.float32), (0, N_pad - C_out))
    beta_p = jnp.pad(beta.astype(jnp.float32), (0, N_pad - C_out))
    scale = (gamma_p * rstd).reshape(1, N_pad)
    shift = (beta_p - mean * gamma_p * rstd).reshape(1, N_pad)

    # ---- kernel 2: y = x*scale + shift, LeakyReLU(0.2), crop channel pad ----
    # (f32 elementwise math — v5e has no bf16 VPU; bf16 input halves HBM reads.
    #  If the patch DMA is still exposed on v6e, pl.Buffered(3) on the patches
    #  in_spec of kernel 1 is the next knob — skip on v7x.)
    def bn_lrelu_kernel(x_ref, scale_ref, shift_ref, o_ref):
        y = x_ref[...].astype(jnp.float32) * scale_ref[...] + shift_ref[...]
        y = jnp.where(y > 0, y, NEG_SLOPE * y)
        o_ref[...] = y[:, :C_out].astype(o_ref.dtype)

    y = pl.pallas_call(
        bn_lrelu_kernel,
        out_shape=jax.ShapeDtypeStruct((M, C_out), out_dtype),
        grid=(grid_m,),
        in_specs=[
            pl.BlockSpec((TM, N_pad), lambda i: (i, 0)),
            pl.BlockSpec((1, N_pad), lambda i: (0, 0)),
            pl.BlockSpec((1, N_pad), lambda i: (0, 0)),
        ],
        out_specs=pl.BlockSpec((TM, C_out), lambda i: (i, 0)),
        compiler_params=pltpu.CompilerParams(
            dimension_semantics=("parallel",)),
    )(conv_out, scale, shift)

    y = y.reshape(N, H_out, W_out, C_out)
    if not nchw_output:
        return y            # keep NHWC between stacked blocks (saves a transpose)
    return jnp.transpose(y, (0, 3, 1, 2))


def _reference(x, weight, gamma, beta, stride):
    """Plain-JAX f32 reference of the PyTorch module (training-mode BN)."""
    xp = jnp.pad(x, ((0, 0), (0, 0), (PAD, PAD), (PAD, PAD)), mode="reflect")
    conv = jax.lax.conv_general_dilated(
        xp, weight, window_strides=(stride, stride), padding="VALID",
        dimension_numbers=("NCHW", "OIHW", "NCHW"),
        precision=jax.lax.Precision.HIGHEST)
    mean = jnp.mean(conv, axis=(0, 2, 3), keepdims=True)
    var = jnp.mean((conv - mean) ** 2, axis=(0, 2, 3), keepdims=True)
    xn = (conv - mean) * jax.lax.rsqrt(var + EPS)
    y = xn * gamma.reshape(1, -1, 1, 1) + beta.reshape(1, -1, 1, 1)
    return jnp.where(y > 0, y, NEG_SLOPE * y)


def _run_case(key, N, C_in, H, W, C_out, stride, **kwargs):
    kx, kw, kg, kb = jax.random.split(key, 4)
    x = jax.random.normal(kx, (N, C_in, H, W), dtype=jnp.float32)
    weight = jax.random.normal(kw, (C_out, C_in, KH, KW), dtype=jnp.float32) * 0.05
    gamma = 1.0 + 0.1 * jax.random.normal(kg, (C_out,), dtype=jnp.float32)
    beta = 0.1 * jax.random.normal(kb, (C_out,), dtype=jnp.float32)

    fwd = jax.jit(functools.partial(cnn_block_forward, stride=stride, **kwargs))
    out = fwd(x, weight, gamma, beta)
    jax.block_until_ready(out)

    H_out = (H + 2 * PAD - KH) // stride + 1
    W_out = (W + 2 * PAD - KW) // stride + 1
    assert out.shape == (N, C_out, H_out, W_out), out.shape

    ref = _reference(x, weight, gamma, beta, stride)
    max_err = float(jnp.max(jnp.abs(out - ref)))
    assert max_err < 5e-2, f"max abs err {max_err}"


if __name__ == "__main__":
    key = jax.random.PRNGKey(0)
    k1, k2, k3 = jax.random.split(key, 3)
    # (1) Spec's small shapes, stride 2, tiles divide exactly.
    _run_case(k1, 2, 4, 16, 16, 8, 2)
    # (2) stride 1, C_in=3 (channel padding) and a partial M tile (M=578).
    _run_case(k2, 2, 3, 18, 18, 8, 1)
    # (3) multiple M tiles with a partial last tile + multi-step K accumulation.
    _run_case(k3, 2, 16, 40, 40, 8, 1, tile_k=128)
    print("KERNEL_OK")
</pallas_src>

<mosaic_0001>
module attributes {stable_mosaic.version = 11 : i64} {
  func.func @conv_gemm_kernel(%arg0: i32, %arg1: i32, %arg2: memref<128x128xbf16, #tpu.memory_space<vmem>>, %arg3: memref<128x128xbf16, #tpu.memory_space<vmem>>, %arg4: memref<128x128xbf16, #tpu.memory_space<vmem>>, %arg5: memref<8x128xf32, #tpu.memory_space<vmem>>, %arg6: memref<8x128xf32, #tpu.memory_space<vmem>>, %arg7: memref<128x128xf32, #tpu.memory_space<vmem>>) attributes {dimension_semantics = [#tpu.dimension_semantics<parallel>, #tpu.dimension_semantics<arbitrary>], iteration_bounds = array<i64: 1, 1>, scalar_prefetch = 0 : i64, scratch_operands = 1 : i64, tpu.core_type = #tpu.core_type<tc>, window_params = [{transform_indices = @transform_0, window_bounds = array<i64: 128, 128>}, {pipeline_mode = #tpu.pipeline_mode<synchronous>, transform_indices = @transform_1, window_bounds = array<i64: 128, 128>}, {transform_indices = @transform_2, window_bounds = array<i64: 128, 128>}, {transform_indices = @transform_3, window_bounds = array<i64: 8, 128>}, {transform_indices = @transform_4, window_bounds = array<i64: 8, 128>}]} {
    %c0_i32 = arith.constant 0 : i32
    %0 = arith.cmpi eq, %arg1, %c0_i32 : i32
    %1 = arith.extui %0 : i1 to i32
    %c0_i32_0 = arith.constant 0 : i32
    %2 = arith.cmpi ne, %1, %c0_i32_0 : i32
    scf.if %2 {
      %cst_9 = arith.constant 0.000000e+00 : f32
      %15 = vector.broadcast %cst_9 : f32 to vector<128x128xf32>
      %c0_10 = arith.constant 0 : index
      %c0_11 = arith.constant 0 : index
      %16 = vector.load %arg7[%c0_10, %c0_11] : memref<128x128xf32, #tpu.memory_space<vmem>>, vector<128x128xf32>
      tpu.vector_store %arg7[%c0_10, %c0_11], %15 {strides = array<i32>} : memref<128x128xf32, #tpu.memory_space<vmem>>, vector<128x128xf32>,
    } else {
    }
    %c128_i32 = arith.constant 128 : i32
    %3 = arith.muli %arg1, %c128_i32 : i32
    %4 = tpu.assume_multiple %3, 128 : i32
    %c0 = arith.constant 0 : index
    %c0_1 = arith.constant 0 : index
    %5 = vector.load %arg7[%c0, %c0_1] : memref<128x128xf32, #tpu.memory_space<vmem>>, vector<128x128xf32>
    %c0_2 = arith.constant 0 : index
    %c0_3 = arith.constant 0 : index
    %6 = vector.load %arg2[%c0_2, %c0_3] : memref<128x128xbf16, #tpu.memory_space<vmem>>, vector<128x128xbf16>
    %7 = arith.index_cast %4 : i32 to index
    %c0_4 = arith.constant 0 : index
    %8 = vector.load %arg3[%7, %c0_4] : memref<128x128xbf16, #tpu.memory_space<vmem>>, vector<128x128xbf16>
    %cst = arith.constant dense<0.000000e+00> : vector<128x128xf32>
    %9 = tpu.matmul %6, %8, %cst {dimension_numbers = #tpu.dot_dimension_numbers<[1], [0], [0], [1], [0, 0, 1, 1], [], []>} : vector<128x128xbf16>, vector<128x128xbf16>, vector<128x128xf32> -> vector<128x128xf32>
    %10 = arith.addf %5, %9 : vector<128x128xf32>
    %c0_5 = arith.constant 0 : index
    %c0_6 = arith.constant 0 : index
    %11 = vector.load %arg7[%c0_5, %c0_6] : memref<128x128xf32, #tpu.memory_space<vmem>>, vector<128x128xf32>
    tpu.vector_store %arg7[%c0_5, %c0_6], %10 {strides = array<i32>} : memref<128x128xf32, #tpu.memory_space<vmem>>, vector<128x128xf32>,
    %c0_i32_7 = arith.constant 0 : i32
    %12 = arith.cmpi eq, %arg1, %c0_i32_7 : i32
    %13 = arith.extui %12 : i1 to i32
    %c0_i32_8 = arith.constant 0 : i32
    %14 = arith.cmpi ne, %13, %c0_i32_8 : i32
    scf.if %14 {
      %c0_9 = arith.constant 0 : index
      %c0_10 = arith.constant 0 : index
      %15 = vector.load %arg7[%c0_9, %c0_10] : memref<128x128xf32, #tpu.memory_space<vmem>>, vector<128x128xf32>
      %16 = arith.truncf %15 : vector<128x128xf32> to vector<128x128xbf16>
      %c0_11 = arith.constant 0 : index
      %c0_12 = arith.constant 0 : index
      %17 = vector.load %arg4[%c0_11, %c0_12] : memref<128x128xbf16, #tpu.memory_space<vmem>>, vector<128x128xbf16>
      tpu.vector_store %arg4[%c0_11, %c0_12], %16 {strides = array<i32>} : memref<128x128xbf16, #tpu.memory_space<vmem>>, vector<128x128xbf16>,
      %c128_i32_13 = arith.constant 128 : i32
      %18 = arith.muli %arg0, %c128_i32_13 : i32
      %19 = tpu.iota {dimensions = array<i32: 0>} : vector<128x1xi32>
      %20 = vector.broadcast %18 : i32 to vector<128x1xi32>
      %21 = arith.addi %20, %19 : vector<128x1xi32>
      %c128_i32_14 = arith.constant 128 : i32
      %22 = vector.broadcast %c128_i32_14 : i32 to vector<128x1xi32>
      %23 = arith.cmpi slt, %21, %22 : vector<128x1xi32>
      %cst_15 = arith.constant 0.000000e+00 : f32
      %24 = vector.shape_cast %23 : vector<128x1xi1> to vector<128x1xi1>
      %25 = vector.broadcast %24 : vector<128x1xi1> to vector<128x128xi1>
      %26 = vector.broadcast %cst_15 : f32 to vector<128x128xf32>
      %27 = arith.select %25, %15, %26 : vector<128x128xi1>, vector<128x128xf32>
      %28 = vector.shape_cast %27 : vector<128x128xf32> to vector<16x8x128xf32>
      %cst_16 = arith.constant dense<0.000000e+00> : vector<8x128xf32>
      %29 = vector.multi_reduction <add>, %28, %cst_16 [0] : vector<16x8x128xf32> to vector<8x128xf32>
      %c0_17 = arith.constant 0 : index
      %c0_18 = arith.constant 0 : index
      %30 = vector.load %arg5[%c0_17, %c0_18] : memref<8x128xf32, #tpu.memory_space<vmem>>, vector<8x128xf32>
      tpu.vector_store %arg5[%c0_17, %c0_18], %29 {strides = array<i32>} : memref<8x128xf32, #tpu.memory_space<vmem>>, vector<8x128xf32>,
      %31 = arith.mulf %27, %27 : vector<128x128xf32>
      %32 = vector.shape_cast %31 : vector<128x128xf32> to vector<16x8x128xf32>
      %cst_19 = arith.constant dense<0.000000e+00> : vector<8x128xf32>
      %33 = vector.multi_reduction <add>, %32, %cst_19 [0] : vector<16x8x128xf32> to vector<8x128xf32>
      %c0_20 = arith.constant 0 : index
      %c0_21 = arith.constant 0 : index
      %34 = vector.load %arg6[%c0_20, %c0_21] : memref<8x128xf32, #tpu.memory_space<vmem>>, vector<8x128xf32>
      tpu.vector_store %arg6[%c0_20, %c0_21], %33 {strides = array<i32>} : memref<8x128xf32, #tpu.memory_space<vmem>>, vector<8x128xf32>,
    } else {
    }
    return
  }
  func.func @transform_0(%arg0: i32, %arg1: i32) -> (i32, i32) {
    %c0_i32 = arith.constant 0 : i32
    return %arg0, %arg1 : i32, i32
  }
  func.func @transform_1(%arg0: i32, %arg1: i32) -> (i32, i32) {
    %c0_i32 = arith.constant 0 : i32
    %c0_i32_0 = arith.constant 0 : i32
    %c0_i32_1 = arith.constant 0 : i32
    return %c0_i32, %c0_i32_0 : i32, i32
  }
  func.func @transform_2(%arg0: i32, %arg1: i32) -> (i32, i32) {
    %c0_i32 = arith.constant 0 : i32
    %c0_i32_0 = arith.constant 0 : i32
    return %arg0, %c0_i32 : i32, i32
  }
  func.func @transform_3(%arg0: i32, %arg1: i32) -> (i32, i32) {
    %c0_i32 = arith.constant 0 : i32
    %c0_i32_0 = arith.constant 0 : i32
    return %arg0, %c0_i32 : i32, i32
  }
  func.func @transform_4(%arg0: i32, %arg1: i32) -> (i32, i32) {
    %c0_i32 = arith.constant 0 : i32
    %c0_i32_0 = arith.constant 0 : i32
    return %arg0, %c0_i32 : i32, i32
  }
}

module attributes {stable_mosaic.version = 11 : i64} {
  func.func @bn_lrelu_kernel(%arg0: i32, %arg1: memref<128x128xbf16, #tpu.memory_space<vmem>>, %arg2: memref<1x128xf32, #tpu.memory_space<vmem>>, %arg3: memref<1x128xf32, #tpu.memory_space<vmem>>, %arg4: memref<128x8xf32, #tpu.memory_space<vmem>>) attributes {dimension_semantics = [#tpu.dimension_semantics<parallel>], iteration_bounds = array<i64: 1>, scalar_prefetch = 0 : i64, scratch_operands = 0 : i64, tpu.core_type = #tpu.core_type<tc>, window_params = [{transform_indices = @transform_0, window_bounds = array<i64: 128, 128>}, {pipeline_mode = #tpu.pipeline_mode<synchronous>, transform_indices = @transform_1, window_bounds = array<i64: 1, 128>}, {pipeline_mode = #tpu.pipeline_mode<synchronous>, transform_indices = @transform_2, window_bounds = array<i64: 1, 128>}, {transform_indices = @transform_3, window_bounds = array<i64: 128, 8>}]} {
    %c0 = arith.constant 0 : index
    %c0_0 = arith.constant 0 : index
    %0 = vector.load %arg1[%c0, %c0_0] : memref<128x128xbf16, #tpu.memory_space<vmem>>, vector<128x128xbf16>
    %1 = arith.extf %0 : vector<128x128xbf16> to vector<128x128xf32>
    %c0_1 = arith.constant 0 : index
    %c0_2 = arith.constant 0 : index
    %2 = vector.load %arg2[%c0_1, %c0_2] : memref<1x128xf32, #tpu.memory_space<vmem>>, vector<1x128xf32>
    %3 = vector.broadcast %2 : vector<1x128xf32> to vector<128x128xf32>
    %4 = arith.mulf %1, %3 : vector<128x128xf32>
    %c0_3 = arith.constant 0 : index
    %c0_4 = arith.constant 0 : index
    %5 = vector.load %arg3[%c0_3, %c0_4] : memref<1x128xf32, #tpu.memory_space<vmem>>, vector<1x128xf32>
    %6 = vector.broadcast %5 : vector<1x128xf32> to vector<128x128xf32>
    %7 = arith.addf %4, %6 : vector<128x128xf32>
    %cst = arith.constant 0.000000e+00 : f32
    %8 = vector.broadcast %cst : f32 to vector<128x128xf32>
    %9 = arith.cmpf ogt, %7, %8 : vector<128x128xf32>
    %cst_5 = arith.constant 2.000000e-01 : f32
    %10 = vector.broadcast %cst_5 : f32 to vector<128x128xf32>
    %11 = arith.mulf %10, %7 : vector<128x128xf32>
    %12 = arith.select %9, %7, %11 : vector<128x128xi1>, vector<128x128xf32>
    %13 = vector.extract_strided_slice %12 {offsets = [0, 0], sizes = [128, 8], strides = [1, 1]} : vector<128x128xf32> to vector<128x8xf32>
    %c0_6 = arith.constant 0 : index
    %c0_7 = arith.constant 0 : index
    %14 = vector.load %arg4[%c0_6, %c0_7] : memref<128x8xf32, #tpu.memory_space<vmem>>, vector<128x8xf32>
    tpu.vector_store %arg4[%c0_6, %c0_7], %13 {strides = array<i32>} : memref<128x8xf32, #tpu.memory_space<vmem>>, vector<128x8xf32>,
    return
  }
  func.func @transform_0(%arg0: i32) -> (i32, i32) {
    %c0_i32 = arith.constant 0 : i32
    %c0_i32_0 = arith.constant 0 : i32
    return %arg0, %c0_i32 : i32, i32
  }
  func.func @transform_1(%arg0: i32) -> (i32, i32) {
    %c0_i32 = arith.constant 0 : i32
    %c0_i32_0 = arith.constant 0 : i32
    %c0_i32_1 = arith.constant 0 : i32
    return %c0_i32, %c0_i32_0 : i32, i32
  }
  func.func @transform_2(%arg0: i32) -> (i32, i32) {
    %c0_i32 = arith.constant 0 : i32
    %c0_i32_0 = arith.constant 0 : i32
    %c0_i32_1 = arith.constant 0 : i32
    return %c0_i32, %c0_i32_0 : i32, i32
  }
  func.func @transform_3(%arg0: i32) -> (i32, i32) {
    %c0_i32 = arith.constant 0 : i32
    %c0_i32_0 = arith.constant 0 : i32
    return %arg0, %c0_i32 : i32, i32
  }
}

</mosaic_0001>

<llo_original>
// kernel: cnn_block_forward.3
$region0: #{cnn_block_forward.3}
  #allocation0 [shape = 'u32[]', space=smem, size = 0x4, offset = 0x4, fixed_abs, tag = 'smem constant byte address 0x4 - core index']
  #allocation1 [shape = 'u32[144,128]{1,0:T(1,128)}', space=vmem, size = 0x12000, scoped, tag = 'internal scratch']
  %s0 = inlined_call_operand.vmem [shape: bf16[128,128], index: 0, kind: input, shape index: {}]
  %s1 = inlined_call_operand.vmem [shape: f32[1,128], index: 1, kind: input, shape index: {}]
  %s2 = inlined_call_operand.vmem [shape: f32[1,128], index: 2, kind: input, shape index: {}]
  %s3 = inlined_call_operand.vmem [shape: f32[128,8], index: 3, kind: output, shape index: {}]
  %s4 = sld [smem:[#allocation0]]
  $region22: #{cnn_block_forward.3} parent=0
    _
  %s6 = ssub.s32 1, %s4
  %s7 = scalar_select 0, %s6, %s4
  // Predicated region
  $region2: #{cnn_block_forward.3} parent=0 // pred_check
    _
  $region3: #{cnn_block_forward.3} parent=0 // pred_check_branch
    %9 = sbr.rel (0) target = $region5
  $region4: #{cnn_block_forward.3} parent=0 // pred_region
    _
  $region5: #{cnn_block_forward.3} parent=0 // pred_fallthru
    _
  // Predicated region
  $region6: #{cnn_block_forward.3} parent=0 // pred_check
    _
  $region7: #{cnn_block_forward.3} parent=0 // pred_check_branch
    %11 = sbr.rel (0) target = $region9
  $region8: #{cnn_block_forward.3} parent=0 // pred_region
    _
  $region9: #{cnn_block_forward.3} parent=0 // pred_fallthru
    _
  // Predicated region
  $region10: #{cnn_block_forward.3} parent=0 // pred_check
    _
  $region11: #{cnn_block_forward.3} parent=0 // pred_check_branch
    %13 = sbr.rel (0) target = $region13
  $region12: #{cnn_block_forward.3} parent=0 // pred_region
    _
  $region13: #{cnn_block_forward.3} parent=0 // pred_fallthru
    _
  %v14 = vld [vmem:[%s0] sm:$0xf]
  %v15 = vld [vmem:[%s0 + $0x4] sm:$0xf]
  %v16 = vld [vmem:[%s0 + $0x8] sm:$0xf]
  %v17 = vld [vmem:[%s0 + $0xc] sm:$0xf]
  %v18 = vld [vmem:[%s0 + $0x10] sm:$0xf]
  %v19 = vld [vmem:[%s0 + $0x14] sm:$0xf]
  %v20 = vld [vmem:[%s0 + $0x18] sm:$0xf]
  %v21 = vld [vmem:[%s0 + $0x1c] sm:$0xf]
  %v22 = vld [vmem:[%s0 + $0x20] sm:$0xf]
  %v23 = vld [vmem:[%s0 + $0x24] sm:$0xf]
  %v24 = vld [vmem:[%s0 + $0x28] sm:$0xf]
  %v25 = vld [vmem:[%s0 + $0x2c] sm:$0xf]
  %v26 = vld [vmem:[%s0 + $0x30] sm:$0xf]
  %v27 = vld [vmem:[%s0 + $0x34] sm:$0xf]
  %v28 = vld [vmem:[%s0 + $0x38] sm:$0xf]
  %v29 = vld [vmem:[%s0 + $0x3c] sm:$0xf]
  %v30 = vunpack.c.l.bf16 %v14
  %v31 = vunpack.c.l.bf16 %v15
  %v32 = vunpack.c.l.bf16 %v16
  %v33 = vunpack.c.l.bf16 %v17
  %v34 = vunpack.c.l.bf16 %v18
  %v35 = vunpack.c.l.bf16 %v19
  %v36 = vunpack.c.l.bf16 %v20
  %v37 = vunpack.c.l.bf16 %v21
  %v38 = vunpack.c.l.bf16 %v22
  %v39 = vunpack.c.l.bf16 %v23
  %v40 = vunpack.c.l.bf16 %v24
  %v41 = vunpack.c.l.bf16 %v25
  %v42 = vunpack.c.l.bf16 %v26
  %v43 = vunpack.c.l.bf16 %v27
  %v44 = vunpack.c.l.bf16 %v28
  %v45 = vunpack.c.l.bf16 %v29
  %v46 = vld [vmem:[%s1] sm:$0x1]
  %v48 = vlaneseq
  %v49 = vshrl.u32 %v48, 7
  %v50 = vsub.s32 0, %v49
  %v51 = vrot.slane %v46, %v50
  %v53 = vmul.f32 %v30, %v51
  %v54 = vmul.f32 %v31, %v51
  %v55 = vmul.f32 %v32, %v51
  %v56 = vmul.f32 %v33, %v51
  %v57 = vmul.f32 %v34, %v51
  %v58 = vmul.f32 %v35, %v51
  %v59 = vmul.f32 %v36, %v51
  %v60 = vmul.f32 %v37, %v51
  %v61 = vmul.f32 %v38, %v51
  %v62 = vmul.f32 %v39, %v51
  %v63 = vmul.f32 %v40, %v51
  %v64 = vmul.f32 %v41, %v51
  %v65 = vmul.f32 %v42, %v51
  %v66 = vmul.f32 %v43, %v51
  %v67 = vmul.f32 %v44, %v51
  %v68 = vmul.f32 %v45, %v51
  %v69 = vld [vmem:[%s2] sm:$0x1]
  %v71 = vlaneseq
  %v72 = vshrl.u32 %v71, 7
  %v73 = vsub.s32 0, %v72
  %v74 = vrot.slane %v69, %v73
  %v76 = vadd.f32 %v53, %v74
  %v77 = vadd.f32 %v54, %v74
  %v78 = vadd.f32 %v55, %v74
  %v79 = vadd.f32 %v56, %v74
  %v80 = vadd.f32 %v57, %v74
  %v81 = vadd.f32 %v58, %v74
  %v82 = vadd.f32 %v59, %v74
  %v83 = vadd.f32 %v60, %v74
  %v84 = vadd.f32 %v61, %v74
  %v85 = vadd.f32 %v62, %v74
  %v86 = vadd.f32 %v63, %v74
  %v87 = vadd.f32 %v64, %v74
  %v88 = vadd.f32 %v65, %v74
  %v89 = vadd.f32 %v66, %v74
  %v90 = vadd.f32 %v67, %v74
  %v91 = vadd.f32 %v68, %v74
  %vm92 = vcmp.gt.f32.partialorder %v76, 0.0
  %vm93 = vcmp.gt.f32.partialorder %v77, 0.0
  %vm94 = vcmp.gt.f32.partialorder %v78, 0.0
  %vm95 = vcmp.gt.f32.partialorder %v79, 0.0
  %vm96 = vcmp.gt.f32.partialorder %v80, 0.0
  %vm97 = vcmp.gt.f32.partialorder %v81, 0.0
  %vm98 = vcmp.gt.f32.partialorder %v82, 0.0
  %vm99 = vcmp.gt.f32.partialorder %v83, 0.0
  %vm100 = vcmp.gt.f32.partialorder %v84, 0.0
  %vm101 = vcmp.gt.f32.partialorder %v85, 0.0
  %vm102 = vcmp.gt.f32.partialorder %v86, 0.0
  %vm103 = vcmp.gt.f32.partialorder %v87, 0.0
  %vm104 = vcmp.gt.f32.partialorder %v88, 0.0
  %vm105 = vcmp.gt.f32.partialorder %v89, 0.0
  %vm106 = vcmp.gt.f32.partialorder %v90, 0.0
  %vm107 = vcmp.gt.f32.partialorder %v91, 0.0
  %v108 = vmul.f32 %v76, 0.2
  %v109 = vmul.f32 %v77, 0.2
  %v110 = vmul.f32 %v78, 0.2
  %v111 = vmul.f32 %v79, 0.2
  %v112 = vmul.f32 %v80, 0.2
  %v113 = vmul.f32 %v81, 0.2
  %v114 = vmul.f32 %v82, 0.2
  %v115 = vmul.f32 %v83, 0.2
  %v116 = vmul.f32 %v84, 0.2
  %v117 = vmul.f32 %v85, 0.2
  %v118 = vmul.f32 %v86, 0.2
  %v119 = vmul.f32 %v87, 0.2
  %v120 = vmul.f32 %v88, 0.2
  %v121 = vmul.f32 %v89, 0.2
  %v122 = vmul.f32 %v90, 0.2
  %v123 = vmul.f32 %v91, 0.2
  %v124 = vsel %vm92, %v76, %v108
  %v125 = vsel %vm93, %v77, %v109
  %v126 = vsel %vm94, %v78, %v110
  %v127 = vsel %vm95, %v79, %v111
  %v128 = vsel %vm96, %v80, %v112
  %v129 = vsel %vm97, %v81, %v113
  %v130 = vsel %vm98, %v82, %v114
  %v131 = vsel %vm99, %v83, %v115
  %v132 = vsel %vm100, %v84, %v116
  %v133 = vsel %vm101, %v85, %v117
  %v134 = vsel %vm102, %v86, %v118
  %v135 = vsel %vm103, %v87, %v119
  %v136 = vsel %vm104, %v88, %v120
  %v137 = vsel %vm105, %v89, %v121
  %v138 = vsel %vm106, %v90, %v122
  %v139 = vsel %vm107, %v91, %v123
  %vm140 = vcmask 64512
  %141 = vst.msk [vmem:[%s3] sm:$0xff] %vm140, %v124
  %142 = vst.msk [vmem:[%s3 + $0x8] sm:$0xff] %vm140, %v125
  %143 = vst.msk [vmem:[%s3 + $0x10] sm:$0xff] %vm140, %v126
  %144 = vst.msk [vmem:[%s3 + $0x18] sm:$0xff] %vm140, %v127
  %145 = vst.msk [vmem:[%s3 + $0x20] sm:$0xff] %vm140, %v128
  %146 = vst.msk [vmem:[%s3 + $0x28] sm:$0xff] %vm140, %v129
  %147 = vst.msk [vmem:[%s3 + $0x30] sm:$0xff] %vm140, %v130
  %148 = vst.msk [vmem:[%s3 + $0x38] sm:$0xff] %vm140, %v131
  %149 = vst.msk [vmem:[%s3 + $0x40] sm:$0xff] %vm140, %v132
  %150 = vst.msk [vmem:[%s3 + $0x48] sm:$0xff] %vm140, %v133
  %151 = vst.msk [vmem:[%s3 + $0x50] sm:$0xff] %vm140, %v134
  %152 = vst.msk [vmem:[%s3 + $0x58] sm:$0xff] %vm140, %v135
  %153 = vst.msk [vmem:[%s3 + $0x60] sm:$0xff] %vm140, %v136
  %154 = vst.msk [vmem:[%s3 + $0x68] sm:$0xff] %vm140, %v137
  %155 = vst.msk [vmem:[%s3 + $0x70] sm:$0xff] %vm140, %v138
  %156 = vst.msk [vmem:[%s3 + $0x78] sm:$0xff] %vm140, %v139
  // Predicated region
  $region14: #{cnn_block_forward.3} parent=0 // pred_check
    _
  $region15: #{cnn_block_forward.3} parent=0 // pred_check_branch
    %158 = sbr.rel (0) target = $region17
  $region16: #{cnn_block_forward.3} parent=0 // pred_region
    _
  $region17: #{cnn_block_forward.3} parent=0 // pred_fallthru
    _
  // Predicated region
  $region18: #{cnn_block_forward.3} parent=0 // pred_check
    _
  $region19: #{cnn_block_forward.3} parent=0 // pred_check_branch
    %160 = sbr.rel (0) target = $region21
  $region20: #{cnn_block_forward.3} parent=0 // pred_region
    _
  $region21: #{cnn_block_forward.3} parent=0 // pred_fallthru
    _

// kernel: cnn_block_forward.2
$region0: #{cnn_block_forward.2}
  #allocation0 [shape = 'u32[]', space=smem, size = 0x4, offset = 0x4, fixed_abs, tag = 'smem constant byte address 0x4 - core index']
  #allocation1 [shape = 'u32[144,128]{1,0:T(1,128)}', space=vmem, size = 0x12000, scoped, tag = 'internal scratch']
  #allocation2 [shape = 'f32[128,128]{1,0:T(8,128)}', space=vmem, size = 0x10000, scoped, tag = 'scratch operand']
  %s0 = inlined_call_operand.vmem [shape: bf16[128,128], index: 0, kind: input, shape index: {}]
  %s1 = inlined_call_operand.vmem [shape: bf16[128,128], index: 1, kind: input, shape index: {}]
  %s2 = inlined_call_operand.vmem [shape: bf16[128,128], index: 2, kind: output, shape index: {0}]
  %s3 = inlined_call_operand.vmem [shape: f32[8,128], index: 3, kind: output, shape index: {1}]
  %s4 = inlined_call_operand.vmem [shape: f32[8,128], index: 4, kind: output, shape index: {2}]
  %5 = xla_tuple %s2, %s3, %s4
  %s6 = sld [smem:[#allocation0]]
  $region42: #{cnn_block_forward.2} parent=0
    _
  %s8 = ssub.s32 1, %s6
  %s9 = scalar_select 0, %s8, %s6
  // Predicated region
  $region2: #{cnn_block_forward.2} parent=0 // pred_check
    _
  $region3: #{cnn_block_forward.2} parent=0 // pred_check_branch
    %11 = sbr.rel (0) target = $region5
  $region4: #{cnn_block_forward.2} parent=0 // pred_region
    _
  $region5: #{cnn_block_forward.2} parent=0 // pred_fallthru
    _
  // Predicated region
  $region6: #{cnn_block_forward.2} parent=0 // pred_check
    _
  $region7: #{cnn_block_forward.2} parent=0 // pred_check_branch
    %13 = sbr.rel (0) target = $region9
  $region8: #{cnn_block_forward.2} parent=0 // pred_region
    _
  $region9: #{cnn_block_forward.2} parent=0 // pred_fallthru
    _
  %p15 = scmp.eq.s32.totalorder 0, 0
  // Predicated region
  $region10: #{cnn_block_forward.2} parent=0 // pred_check
    %p16 = pneg %p15
  $region11: #{cnn_block_forward.2} parent=0 // pred_check_branch
    %18 = sbr.rel (%p16) target = $region13
  $region12: #{cnn_block_forward.2} parent=0 // pred_region
    %19 = vst [vmem:[#allocation2] sm:$0xff] 0.0
    %20 = vst [vmem:[#allocation2 + $0x8] sm:$0xff] 0.0
    %21 = vst [vmem:[#allocation2 + $0x10] sm:$0xff] 0.0
    %22 = vst [vmem:[#allocation2 + $0x18] sm:$0xff] 0.0
    %23 = vst [vmem:[#allocation2 + $0x20] sm:$0xff] 0.0
    %24 = vst [vmem:[#allocation2 + $0x28] sm:$0xff] 0.0
    %25 = vst [vmem:[#allocation2 + $0x30] sm:$0xff] 0.0
    %26 = vst [vmem:[#allocation2 + $0x38] sm:$0xff] 0.0
    %27 = vst [vmem:[#allocation2 + $0x40] sm:$0xff] 0.0
    %28 = vst [vmem:[#allocation2 + $0x48] sm:$0xff] 0.0
    %29 = vst [vmem:[#allocation2 + $0x50] sm:$0xff] 0.0
    %30 = vst [vmem:[#allocation2 + $0x58] sm:$0xff] 0.0
    %31 = vst [vmem:[#allocation2 + $0x60] sm:$0xff] 0.0
    %32 = vst [vmem:[#allocation2 + $0x68] sm:$0xff] 0.0
    %33 = vst [vmem:[#allocation2 + $0x70] sm:$0xff] 0.0
    %34 = vst [vmem:[#allocation2 + $0x78] sm:$0xff] 0.0
  $region13: #{cnn_block_forward.2} parent=0 // pred_fallthru
    _
  %s35 = smul.u32 0, 128
  %v36 = vld [vmem:[#allocation2] sm:$0xff]
  %v37 = vld [vmem:[#allocation2 + $0x8] sm:$0xff]
  %v38 = vld [vmem:[#allocation2 + $0x10] sm:$0xff]
  %v39 = vld [vmem:[#allocation2 + $0x18] sm:$0xff]
  %v40 = vld [vmem:[#allocation2 + $0x20] sm:$0xff]
  %v41 = vld [vmem:[#allocation2 + $0x28] sm:$0xff]
  %v42 = vld [vmem:[#allocation2 + $0x30] sm:$0xff]
  %v43 = vld [vmem:[#allocation2 + $0x38] sm:$0xff]
  %v44 = vld [vmem:[#allocation2 + $0x40] sm:$0xff]
  %v45 = vld [vmem:[#allocation2 + $0x48] sm:$0xff]
  %v46 = vld [vmem:[#allocation2 + $0x50] sm:$0xff]
  %v47 = vld [vmem:[#allocation2 + $0x58] sm:$0xff]
  %v48 = vld [vmem:[#allocation2 + $0x60] sm:$0xff]
  %v49 = vld [vmem:[#allocation2 + $0x68] sm:$0xff]
  %v50 = vld [vmem:[#allocation2 + $0x70] sm:$0xff]
  %v51 = vld [vmem:[#allocation2 + $0x78] sm:$0xff]
  %v52 = vld [vmem:[%s0] sm:$0xf]
  %v53 = vld [vmem:[%s0 + $0x4] sm:$0xf]
  %v54 = vld [vmem:[%s0 + $0x8] sm:$0xf]
  %v55 = vld [vmem:[%s0 + $0xc] sm:$0xf]
  %v56 = vld [vmem:[%s0 + $0x10] sm:$0xf]
  %v57 = vld [vmem:[%s0 + $0x14] sm:$0xf]
  %v58 = vld [vmem:[%s0 + $0x18] sm:$0xf]
  %v59 = vld [vmem:[%s0 + $0x1c] sm:$0xf]
  %v60 = vld [vmem:[%s0 + $0x20] sm:$0xf]
  %v61 = vld [vmem:[%s0 + $0x24] sm:$0xf]
  %v62 = vld [vmem:[%s0 + $0x28] sm:$0xf]
  %v63 = vld [vmem:[%s0 + $0x2c] sm:$0xf]
  %v64 = vld [vmem:[%s0 + $0x30] sm:$0xf]
  %v65 = vld [vmem:[%s0 + $0x34] sm:$0xf]
  %v66 = vld [vmem:[%s0 + $0x38] sm:$0xf]
  %v67 = vld [vmem:[%s0 + $0x3c] sm:$0xf]
  %s68 = sshra.s32 %s35, 3
  %s69 = sand.u32 %s35, 7
  %s70 = smul.addr %s68, 4
  %s71 = scalar_lea.vmem %s1, %s70
  %v72 = vld [vmem:[%s71] sm:$0xf]
  %v73 = vld [vmem:[%s71 + $0x4] sm:$0xf]
  %v74 = vld [vmem:[%s71 + $0x8] sm:$0xf]
  %v75 = vld [vmem:[%s71 + $0xc] sm:$0xf]
  %v76 = vld [vmem:[%s71 + $0x10] sm:$0xf]
  %v77 = vld [vmem:[%s71 + $0x14] sm:$0xf]
  %v78 = vld [vmem:[%s71 + $0x18] sm:$0xf]
  %v79 = vld [vmem:[%s71 + $0x1c] sm:$0xf]
  %v80 = vld [vmem:[%s71 + $0x20] sm:$0xf]
  %v81 = vld [vmem:[%s71 + $0x24] sm:$0xf]
  %v82 = vld [vmem:[%s71 + $0x28] sm:$0xf]
  %v83 = vld [vmem:[%s71 + $0x2c] sm:$0xf]
  %v84 = vld [vmem:[%s71 + $0x30] sm:$0xf]
  %v85 = vld [vmem:[%s71 + $0x34] sm:$0xf]
  %v86 = vld [vmem:[%s71 + $0x38] sm:$0xf]
  %v87 = vld [vmem:[%s71 + $0x3c] sm:$0xf]
  %v104 = vunpack.c.l.b16 %v52
  %v105 = vunpack.c.l.b16 %v53
  %v106 = vunpack.c.l.b16 %v54
  %v107 = vunpack.c.l.b16 %v55
  %v108 = vunpack.c.l.b16 %v56
  %v109 = vunpack.c.l.b16 %v57
  %v110 = vunpack.c.l.b16 %v58
  %v111 = vunpack.c.l.b16 %v59
  %v112 = vunpack.c.l.b16 %v60
  %v113 = vunpack.c.l.b16 %v61
  %v114 = vunpack.c.l.b16 %v62
  %v115 = vunpack.c.l.b16 %v63
  %v116 = vunpack.c.l.b16 %v64
  %v117 = vunpack.c.l.b16 %v65
  %v118 = vunpack.c.l.b16 %v66
  %v119 = vunpack.c.l.b16 %v67
  %v120 = vpack.c.b16 %v105, %v104
  %v121 = vpack.c.b16 %v107, %v106
  %v122 = vpack.c.b16 %v109, %v108
  %v123 = vpack.c.b16 %v111, %v110
  %v124 = vpack.c.b16 %v113, %v112
  %v125 = vpack.c.b16 %v115, %v114
  %v126 = vpack.c.b16 %v117, %v116
  %v127 = vpack.c.b16 %v119, %v118
  %v152 = vunpack.c.l.b16 %v72
  %v153 = vunpack.c.l.b16 %v73
  %v154 = vunpack.c.l.b16 %v74
  %v155 = vunpack.c.l.b16 %v75
  %v156 = vunpack.c.l.b16 %v76
  %v157 = vunpack.c.l.b16 %v77
  %v158 = vunpack.c.l.b16 %v78
  %v159 = vunpack.c.l.b16 %v79
  %v160 = vunpack.c.l.b16 %v80
  %v161 = vunpack.c.l.b16 %v81
  %v162 = vunpack.c.l.b16 %v82
  %v163 = vunpack.c.l.b16 %v83
  %v164 = vunpack.c.l.b16 %v84
  %v165 = vunpack.c.l.b16 %v85
  %v166 = vunpack.c.l.b16 %v86
  %v167 = vunpack.c.l.b16 %v87
  %v168 = vpack.c.b16 %v153, %v152
  %v169 = vpack.c.b16 %v155, %v154
  %v170 = vpack.c.b16 %v157, %v156
  %v171 = vpack.c.b16 %v159, %v158
  %v172 = vpack.c.b16 %v161, %v160
  %v173 = vpack.c.b16 %v163, %v162
  %v174 = vpack.c.b16 %v165, %v164
  %v175 = vpack.c.b16 %v167, %v166
  %184 = vmatprep.subr.bf16.mxu0 0
  %185 = vmatpush1.bf16.msra.mxu0 %v175
  %186 = vmatprep.subr.bf16.mxu0 0
  %187 = vmatpush1.bf16.msra.mxu0 %v174
  %188 = vmatprep.subr.bf16.mxu0 0
  %189 = vmatpush1.bf16.msra.mxu0 %v173
  %190 = vmatprep.subr.bf16.mxu0 0
  %191 = vmatpush1.bf16.msra.mxu0 %v172
  %192 = vmatprep.subr.bf16.mxu0 0
  %193 = vmatpush1.bf16.msra.mxu0 %v171
  %194 = vmatprep.subr.bf16.mxu0 0
  %195 = vmatpush1.bf16.msra.mxu0 %v170
  %196 = vmatprep.subr.bf16.mxu0 0
  %197 = vmatpush1.bf16.msra.mxu0 %v169
  %198 = vmatprep.subr.bf16.mxu0 0
  %199 = vmatpush1.bf16.msra.mxu0 %v168
  %200 = vmatprep.subr.bf16.mxu0 0
  %201 = vmatpush2.bf16.msra.mxu0 0
  %202 = vmatprep.subr.bf16.mxu0 0
  %203 = vmatpush2.bf16.msra.mxu0 0
  %204 = vmatprep.subr.bf16.mxu0 0
  %205 = vmatpush2.bf16.msra.mxu0 0
  %206 = vmatprep.subr.bf16.mxu0 0
  %207 = vmatpush2.bf16.msra.mxu0 0
  %208 = vmatprep.subr.bf16.mxu0 0
  %209 = vmatpush2.bf16.msra.mxu0 0
  %210 = vmatprep.subr.bf16.mxu0 0
  %211 = vmatpush2.bf16.msra.mxu0 0
  %212 = vmatprep.subr.bf16.mxu0 0
  %213 = vmatpush2.bf16.msra.mxu0 0
  %214 = vmatprep.subr.bf16.mxu0 0
  %215 = vmatpush2.bf16.msra.mxu0 0
  %216 = vmatprep.mubr.bf16.mxu0 0
  %217 = vmatmul.mubr.bf16.gmra.mxu0 %v120
  %v218 = vpop.f32.mrf.mxu0
  %v219 = vadd.f32 0.0, %v218
  %v220 = vpop.f32.mrf.mxu0
  %v221 = vpop.f32.mrf.mxu0
  %v222 = vadd.f32 0.0, %v221
  %v223 = vpop.f32.mrf.mxu0
  %224 = vmatprep.mubr.bf16.mxu0 0
  %225 = vmatmul.mubr.bf16.gmra.mxu0 %v121
  %v226 = vpop.f32.mrf.mxu0
  %v227 = vadd.f32 0.0, %v226
  %v228 = vpop.f32.mrf.mxu0
  %v229 = vpop.f32.mrf.mxu0
  %v230 = vadd.f32 0.0, %v229
  %v231 = vpop.f32.mrf.mxu0
  %232 = vmatprep.mubr.bf16.mxu0 0
  %233 = vmatmul.mubr.bf16.gmra.mxu0 %v122
  %v234 = vpop.f32.mrf.mxu0
  %v235 = vadd.f32 0.0, %v234
  %v236 = vpop.f32.mrf.mxu0
  %v237 = vpop.f32.mrf.mxu0
  %v238 = vadd.f32 0.0, %v237
  %v239 = vpop.f32.mrf.mxu0
  %240 = vmatprep.mubr.bf16.mxu0 0
  %241 = vmatmul.mubr.bf16.gmra.mxu0 %v123
  %v242 = vpop.f32.mrf.mxu0
  %v243 = vadd.f32 0.0, %v242
  %v244 = vpop.f32.mrf.mxu0
  %v245 = vpop.f32.mrf.mxu0
  %v246 = vadd.f32 0.0, %v245
  %v247 = vpop.f32.mrf.mxu0
  %248 = vmatprep.mubr.bf16.mxu0 0
  %249 = vmatmul.mubr.bf16.gmra.mxu0 %v124
  %v250 = vpop.f32.mrf.mxu0
  %v251 = vadd.f32 0.0, %v250
  %v252 = vpop.f32.mrf.mxu0
  %v253 = vpop.f32.mrf.mxu0
  %v254 = vadd.f32 0.0, %v253
  %v255 = vpop.f32.mrf.mxu0
  %256 = vmatprep.mubr.bf16.mxu0 0
  %257 = vmatmul.mubr.bf16.gmra.mxu0 %v125
  %v258 = vpop.f32.mrf.mxu0
  %v259 = vadd.f32 0.0, %v258
  %v260 = vpop.f32.mrf.mxu0
  %v261 = vpop.f32.mrf.mxu0
  %v262 = vadd.f32 0.0, %v261
  %v263 = vpop.f32.mrf.mxu0
  %264 = vmatprep.mubr.bf16.mxu0 0
  %265 = vmatmul.mubr.bf16.gmra.mxu0 %v126
  %v266 = vpop.f32.mrf.mxu0
  %v267 = vadd.f32 0.0, %v266
  %v268 = vpop.f32.mrf.mxu0
  %v269 = vpop.f32.mrf.mxu0
  %v270 = vadd.f32 0.0, %v269
  %v271 = vpop.f32.mrf.mxu0
  %272 = vmatprep.mubr.bf16.mxu0 0
  %273 = vmatmul.mubr.bf16.gmra.mxu0 %v127
  %v274 = vpop.f32.mrf.mxu0
  %v275 = vadd.f32 0.0, %v274
  %v276 = vpop.f32.mrf.mxu0
  %v277 = vpop.f32.mrf.mxu0
  %v278 = vadd.f32 0.0, %v277
  %v279 = vpop.f32.mrf.mxu0
  %280 = vdwg.mxu0
  %v281 = vadd.f32 %v36, %v219
  %v282 = vadd.f32 %v37, %v222
  %v283 = vadd.f32 %v38, %v227
  %v284 = vadd.f32 %v39, %v230
  %v285 = vadd.f32 %v40, %v235
  %v286 = vadd.f32 %v41, %v238
  %v287 = vadd.f32 %v42, %v243
  %v288 = vadd.f32 %v43, %v246
  %v289 = vadd.f32 %v44, %v251
  %v290 = vadd.f32 %v45, %v254
  %v291 = vadd.f32 %v46, %v259
  %v292 = vadd.f32 %v47, %v262
  %v293 = vadd.f32 %v48, %v267
  %v294 = vadd.f32 %v49, %v270
  %v295 = vadd.f32 %v50, %v275
  %v296 = vadd.f32 %v51, %v278
  %297 = vst [vmem:[#allocation2] sm:$0xff] %v281
  %298 = vst [vmem:[#allocation2 + $0x8] sm:$0xff] %v282
  %299 = vst [vmem:[#allocation2 + $0x10] sm:$0xff] %v283
  %300 = vst [vmem:[#allocation2 + $0x18] sm:$0xff] %v284
  %301 = vst [vmem:[#allocation2 + $0x20] sm:$0xff] %v285
  %302 = vst [vmem:[#allocation2 + $0x28] sm:$0xff] %v286
  %303 = vst [vmem:[#allocation2 + $0x30] sm:$0xff] %v287
  %304 = vst [vmem:[#allocation2 + $0x38] sm:$0xff] %v288
  %305 = vst [vmem:[#allocation2 + $0x40] sm:$0xff] %v289
  %306 = vst [vmem:[#allocation2 + $0x48] sm:$0xff] %v290
  %307 = vst [vmem:[#allocation2 + $0x50] sm:$0xff] %v291
  %308 = vst [vmem:[#allocation2 + $0x58] sm:$0xff] %v292
  %309 = vst [vmem:[#allocation2 + $0x60] sm:$0xff] %v293
  %310 = vst [vmem:[#allocation2 + $0x68] sm:$0xff] %v294
  %311 = vst [vmem:[#allocation2 + $0x70] sm:$0xff] %v295
  %312 = vst [vmem:[#allocation2 + $0x78] sm:$0xff] %v296
  // Predicated region
  $region14: #{cnn_block_forward.2} parent=0 // pred_check
    %p313 = pneg %p15
  $region15: #{cnn_block_forward.2} parent=0 // pred_check_branch
    %315 = sbr.rel (%p313) target = $region17
  $region16: #{cnn_block_forward.2} parent=0 // pred_region
    %v316 = vld [vmem:[#allocation2] sm:$0xff]
    %v317 = vld [vmem:[#allocation2 + $0x8] sm:$0xff]
    %v318 = vld [vmem:[#allocation2 + $0x10] sm:$0xff]
    %v319 = vld [vmem:[#allocation2 + $0x18] sm:$0xff]
    %v320 = vld [vmem:[#allocation2 + $0x20] sm:$0xff]
    %v321 = vld [vmem:[#allocation2 + $0x28] sm:$0xff]
    %v322 = vld [vmem:[#allocation2 + $0x30] sm:$0xff]
    %v323 = vld [vmem:[#allocation2 + $0x38] sm:$0xff]
    %v324 = vld [vmem:[#allocation2 + $0x40] sm:$0xff]
    %v325 = vld [vmem:[#allocation2 + $0x48] sm:$0xff]
    %v326 = vld [vmem:[#allocation2 + $0x50] sm:$0xff]
    %v327 = vld [vmem:[#allocation2 + $0x58] sm:$0xff]
    %v328 = vld [vmem:[#allocation2 + $0x60] sm:$0xff]
    %v329 = vld [vmem:[#allocation2 + $0x68] sm:$0xff]
    %v330 = vld [vmem:[#allocation2 + $0x70] sm:$0xff]
    %v331 = vld [vmem:[#allocation2 + $0x78] sm:$0xff]
    %v332 = vpack.c.bf16 %v317, %v316
    %v333 = vpack.c.bf16 %v319, %v318
    %v334 = vpack.c.bf16 %v321, %v320
    %v335 = vpack.c.bf16 %v323, %v322
    %v336 = vpack.c.bf16 %v325, %v324
    %v337 = vpack.c.bf16 %v327, %v326
    %v338 = vpack.c.bf16 %v329, %v328
    %v339 = vpack.c.bf16 %v331, %v330
    %v348 = vunpack.c.l.b16 %v332
    %v349 = vunpack.c.h.b16 %v332
    %v350 = vunpack.c.l.b16 %v333
    %v351 = vunpack.c.h.b16 %v333
    %v352 = vunpack.c.l.b16 %v334
    %v353 = vunpack.c.h.b16 %v334
    %v354 = vunpack.c.l.b16 %v335
    %v355 = vunpack.c.h.b16 %v335
    %v356 = vunpack.c.l.b16 %v336
    %v357 = vunpack.c.h.b16 %v336
    %v358 = vunpack.c.l.b16 %v337
    %v359 = vunpack.c.h.b16 %v337
    %v360 = vunpack.c.l.b16 %v338
    %v361 = vunpack.c.h.b16 %v338
    %v362 = vunpack.c.l.b16 %v339
    %v363 = vunpack.c.h.b16 %v339
    %v364 = vpack.c.b16 %v348, %v348
    %v365 = vpack.c.b16 %v349, %v349
    %v366 = vpack.c.b16 %v350, %v350
    %v367 = vpack.c.b16 %v351, %v351
    %v368 = vpack.c.b16 %v352, %v352
    %v369 = vpack.c.b16 %v353, %v353
    %v370 = vpack.c.b16 %v354, %v354
    %v371 = vpack.c.b16 %v355, %v355
    %v372 = vpack.c.b16 %v356, %v356
    %v373 = vpack.c.b16 %v357, %v357
    %v374 = vpack.c.b16 %v358, %v358
    %v375 = vpack.c.b16 %v359, %v359
    %v376 = vpack.c.b16 %v360, %v360
    %v377 = vpack.c.b16 %v361, %v361
    %v378 = vpack.c.b16 %v362, %v362
    %v379 = vpack.c.b16 %v363, %v363
    %396 = vst [vmem:[%s2] sm:$0xf] %v364
    %397 = vst [vmem:[%s2 + $0x4] sm:$0xf] %v365
    %398 = vst [vmem:[%s2 + $0x8] sm:$0xf] %v366
    %399 = vst [vmem:[%s2 + $0xc] sm:$0xf] %v367
    %400 = vst [vmem:[%s2 + $0x10] sm:$0xf] %v368
    %401 = vst [vmem:[%s2 + $0x14] sm:$0xf] %v369
    %402 = vst [vmem:[%s2 + $0x18] sm:$0xf] %v370
    %403 = vst [vmem:[%s2 + $0x1c] sm:$0xf] %v371
    %404 = vst [vmem:[%s2 + $0x20] sm:$0xf] %v372
    %405 = vst [vmem:[%s2 + $0x24] sm:$0xf] %v373
    %406 = vst [vmem:[%s2 + $0x28] sm:$0xf] %v374
    %407 = vst [vmem:[%s2 + $0x2c] sm:$0xf] %v375
    %408 = vst [vmem:[%s2 + $0x30] sm:$0xf] %v376
    %409 = vst [vmem:[%s2 + $0x34] sm:$0xf] %v377
    %410 = vst [vmem:[%s2 + $0x38] sm:$0xf] %v378
    %411 = vst [vmem:[%s2 + $0x3c] sm:$0xf] %v379
    %s412 = smul.u32 0, 128
    %v413 = vlaneseq
    %v414 = vshrl.u32 %v413, 7
    %v415 = vadd.s32 %v414, 8
    %v416 = vadd.s32 %v414, 16
    %v417 = vadd.s32 %v414, 24
    %v418 = vadd.s32 %v414, 32
    %v419 = vadd.s32 %v414, 40
    %v420 = vadd.s32 %v414, 48
    %v421 = vadd.s32 %v414, 56
    %v422 = vadd.s32 %v414, 64
    %v423 = vadd.s32 %v414, 72
    %v424 = vadd.s32 %v414, 80
    %v425 = vadd.s32 %v414, 88
    %v426 = vadd.s32 %v414, 96
    %v427 = vadd.s32 %v414, 104
    %v428 = vadd.s32 %v414, 112
    %v429 = vadd.s32 %v414, 120
    %v430 = vstv %s412
    %v431 = vadd.s32 %v430, %v414
    %v432 = vadd.s32 %v430, %v415
    %v433 = vadd.s32 %v430, %v416
    %v434 = vadd.s32 %v430, %v417
    %v435 = vadd.s32 %v430, %v418
    %v436 = vadd.s32 %v430, %v419
    %v437 = vadd.s32 %v430, %v420
    %v438 = vadd.s32 %v430, %v421
    %v439 = vadd.s32 %v430, %v422
    %v440 = vadd.s32 %v430, %v423
    %v441 = vadd.s32 %v430, %v424
    %v442 = vadd.s32 %v430, %v425
    %v443 = vadd.s32 %v430, %v426
    %v444 = vadd.s32 %v430, %v427
    %v445 = vadd.s32 %v430, %v428
    %v446 = vadd.s32 %v430, %v429
    %vm447 = vcmp.lt.s32.totalorder %v431, 128
    %vm448 = vcmp.lt.s32.totalorder %v432, 128
    %vm449 = vcmp.lt.s32.totalorder %v433, 128
    %vm450 = vcmp.lt.s32.totalorder %v434, 128
    %vm451 = vcmp.lt.s32.totalorder %v435, 128
    %vm452 = vcmp.lt.s32.totalorder %v436, 128
    %vm453 = vcmp.lt.s32.totalorder %v437, 128
    %vm454 = vcmp.lt.s32.totalorder %v438, 128
    %vm455 = vcmp.lt.s32.totalorder %v439, 128
    %vm456 = vcmp.lt.s32.totalorder %v440, 128
    %vm457 = vcmp.lt.s32.totalorder %v441, 128
    %vm458 = vcmp.lt.s32.totalorder %v442, 128
    %vm459 = vcmp.lt.s32.totalorder %v443, 128
    %vm460 = vcmp.lt.s32.totalorder %v444, 128
    %vm461 = vcmp.lt.s32.totalorder %v445, 128
    %vm462 = vcmp.lt.s32.totalorder %v446, 128
    %v463 = vsel %vm447, 1, 0
    %v464 = vsel %vm448, 1, 0
    %v465 = vsel %vm449, 1, 0
    %v466 = vsel %vm450, 1, 0
    %v467 = vsel %vm451, 1, 0
    %v468 = vsel %vm452, 1, 0
    %v469 = vsel %vm453, 1, 0
    %v470 = vsel %vm454, 1, 0
    %v471 = vsel %vm455, 1, 0
    %v472 = vsel %vm456, 1, 0
    %v473 = vsel %vm457, 1, 0
    %v474 = vsel %vm458, 1, 0
    %v475 = vsel %vm459, 1, 0
    %v476 = vsel %vm460, 1, 0
    %v477 = vsel %vm461, 1, 0
    %v478 = vsel %vm462, 1, 0
    %vm479 = vcmp.eq.s32.totalorder %v463, 1
    %vm480 = vcmp.eq.s32.totalorder %v464, 1
    %vm481 = vcmp.eq.s32.totalorder %v465, 1
    %vm482 = vcmp.eq.s32.totalorder %v466, 1
    %vm483 = vcmp.eq.s32.totalorder %v467, 1
    %vm484 = vcmp.eq.s32.totalorder %v468, 1
    %vm485 = vcmp.eq.s32.totalorder %v469, 1
    %vm486 = vcmp.eq.s32.totalorder %v470, 1
    %vm487 = vcmp.eq.s32.totalorder %v471, 1
    %vm488 = vcmp.eq.s32.totalorder %v472, 1
    %vm489 = vcmp.eq.s32.totalorder %v473, 1
    %vm490 = vcmp.eq.s32.totalorder %v474, 1
    %vm491 = vcmp.eq.s32.totalorder %v475, 1
    %vm492 = vcmp.eq.s32.totalorder %v476, 1
    %vm493 = vcmp.eq.s32.totalorder %v477, 1
    %vm494 = vcmp.eq.s32.totalorder %v478, 1
    %v495 = vsel %vm479, %v316, 0.0
    %v496 = vsel %vm480, %v317, 0.0
    %v497 = vsel %vm481, %v318, 0.0
    %v498 = vsel %vm482, %v319, 0.0
    %v499 = vsel %vm483, %v320, 0.0
    %v500 = vsel %vm484, %v321, 0.0
    %v501 = vsel %vm485, %v322, 0.0
    %v502 = vsel %vm486, %v323, 0.0
    %v503 = vsel %vm487, %v324, 0.0
    %v504 = vsel %vm488, %v325, 0.0
    %v505 = vsel %vm489, %v326, 0.0
    %v506 = vsel %vm490, %v327, 0.0
    %v507 = vsel %vm491, %v328, 0.0
    %v508 = vsel %vm492, %v329, 0.0
    %v509 = vsel %vm493, %v330, 0.0
    %v510 = vsel %vm494, %v331, 0.0
    %v511 = vadd.f32 %v495, %v496
    %v512 = vadd.f32 %v511, %v497
    %v513 = vadd.f32 %v512, %v498
    %v514 = vadd.f32 %v513, %v499
    %v515 = vadd.f32 %v514, %v500
    %v516 = vadd.f32 %v515, %v501
    %v517 = vadd.f32 %v516, %v502
    %v518 = vadd.f32 %v517, %v503
    %v519 = vadd.f32 %v518, %v504
    %v520 = vadd.f32 %v519, %v505
    %v521 = vadd.f32 %v520, %v506
    %v522 = vadd.f32 %v521, %v507
    %v523 = vadd.f32 %v522, %v508
    %v524 = vadd.f32 %v523, %v509
    %v525 = vadd.f32 %v524, %v510
    %526 = vst [vmem:[%s3] sm:$0xff] %v525
    %v527 = vmul.f32 %v495, %v495
    %v528 = vmul.f32 %v496, %v496
    %v529 = vmul.f32 %v497, %v497
    %v530 = vmul.f32 %v498, %v498
    %v531 = vmul.f32 %v499, %v499
    %v532 = vmul.f32 %v500, %v500
    %v533 = vmul.f32 %v501, %v501
    %v534 = vmul.f32 %v502, %v502
    %v535 = vmul.f32 %v503, %v503
    %v536 = vmul.f32 %v504, %v504
    %v537 = vmul.f32 %v505, %v505
    %v538 = vmul.f32 %v506, %v506
    %v539 = vmul.f32 %v507, %v507
    %v540 = vmul.f32 %v508, %v508
    %v541 = vmul.f32 %v509, %v509
    %v542 = vmul.f32 %v510, %v510
    %v543 = vadd.f32 %v527, %v528
    %v544 = vadd.f32 %v543, %v529
    %v545 = vadd.f32 %v544, %v530
    %v546 = vadd.f32 %v545, %v531
    %v547 = vadd.f32 %v546, %v532
    %v548 = vadd.f32 %v547, %v533
    %v549 = vadd.f32 %v548, %v534
    %v550 = vadd.f32 %v549, %v535
    %v551 = vadd.f32 %v550, %v536
    %v552 = vadd.f32 %v551, %v537
    %v553 = vadd.f32 %v552, %v538
    %v554 = vadd.f32 %v553, %v539
    %v555 = vadd.f32 %v554, %v540
    %v556 = vadd.f32 %v555, %v541
    %v557 = vadd.f32 %v556, %v542
    %558 = vst [vmem:[%s4] sm:$0xff] %v557
  $region17: #{cnn_block_forward.2} parent=0 // pred_fallthru
    _
  // Predicated region
  $region18: #{cnn_block_forward.2} parent=0 // pred_check
    _
  $region19: #{cnn_block_forward.2} parent=0 // pred_check_branch
    %560 = sbr.rel (0) target = $region21
  $region20: #{cnn_block_forward.2} parent=0 // pred_region
    _
  $region21: #{cnn_block_forward.2} parent=0 // pred_fallthru
    _
  // Predicated region
  $region22: #{cnn_block_forward.2} parent=0 // pred_check
    _
  $region23: #{cnn_block_forward.2} parent=0 // pred_check_branch
    %562 = sbr.rel (0) target = $region25
  $region24: #{cnn_block_forward.2} parent=0 // pred_region
    _
  $region25: #{cnn_block_forward.2} parent=0 // pred_fallthru
    _
  // Predicated region
  $region26: #{cnn_block_forward.2} parent=0 // pred_check
    _
  $region27: #{cnn_block_forward.2} parent=0 // pred_check_branch
    %564 = sbr.rel (0) target = $region29
  $region28: #{cnn_block_forward.2} parent=0 // pred_region
    _
  $region29: #{cnn_block_forward.2} parent=0 // pred_fallthru
    _
  // Predicated region
  $region30: #{cnn_block_forward.2} parent=0 // pred_check
    _
  $region31: #{cnn_block_forward.2} parent=0 // pred_check_branch
    %566 = sbr.rel (0) target = $region33
  $region32: #{cnn_block_forward.2} parent=0 // pred_region
    _
  $region33: #{cnn_block_forward.2} parent=0 // pred_fallthru
    _
  // Predicated region
  $region34: #{cnn_block_forward.2} parent=0 // pred_check
    _
  $region35: #{cnn_block_forward.2} parent=0 // pred_check_branch
    %568 = sbr.rel (0) target = $region37
  $region36: #{cnn_block_forward.2} parent=0 // pred_region
    _
  $region37: #{cnn_block_forward.2} parent=0 // pred_fallthru
    _
  // Predicated region
  $region38: #{cnn_block_forward.2} parent=0 // pred_check
    _
  $region39: #{cnn_block_forward.2} parent=0 // pred_check_branch
    %570 = sbr.rel (0) target = $region41
  $region40: #{cnn_block_forward.2} parent=0 // pred_region
    _
  $region41: #{cnn_block_forward.2} parent=0 // pred_fallthru
    _

</llo_original>
